<compile_context>
chip_gen: v7x
topology: tpu7x:2x2x1
jax: 0.10.0
libtpu: 0.0.40
codegen_flags: <defaults>
</compile_context>

<pallas_src>
import numpy as np
import jax
import jax.numpy as jnp
from jax.experimental import pallas as pl
from jax.experimental.pallas import tpu as pltpu


# ---------------------------------------------------------------------------
# Planning helpers
# ---------------------------------------------------------------------------

def _round_up(x, m):
    return ((x + m - 1) // m) * m


def _vmem_capacity_bytes():
    """Per-core VMEM capacity; conservative (v7x = 64 MiB) fallback."""
    try:
        cap = int(pltpu.get_tpu_info().vmem_capacity_bytes)
        if cap >= (16 << 20):
            return cap
    except Exception:
        pass
    return 64 << 20


def _mxu_coarse_align():
    """Preferred MXU tile alignment: 256 for v6e/v7x (2x256x256 MXU),
    128 for v5e-class chips (4x128x128)."""
    try:
        kind = jax.devices()[0].device_kind.lower()
    except Exception:
        return 256
    if "v5 lite" in kind or "v5e" in kind or "v5litepod" in kind:
        return 128
    return 256


def _pad_dim(dim, fine, coarse=None):
    """Pad `dim` to a multiple of `fine`; prefer the MXU-native `coarse`
    alignment when it costs <= 12.5% extra padding."""
    p_fine = _round_up(max(dim, 1), fine)
    if coarse and coarse > fine:
        p_coarse = _round_up(max(dim, 1), coarse)
        if p_coarse - p_fine <= max(p_fine // 8, 0):
            return p_coarse
    return p_fine


def _largest_tile(padded, target, align):
    """Largest multiple of `align` that divides `padded` exactly and is
    <= max(target, align).  Divisor tiles => zero padded-block MXU/DMA waste."""
    target = max(int(target), align)
    best = align
    units = 1
    while units * align <= min(target, padded):
        t = units * align
        if padded % t == 0:
            best = t
        units += 1
    return best


# ---------------------------------------------------------------------------
# Kernel
# ---------------------------------------------------------------------------

def _make_linear_kernel(has_bias):
    """Tiled (i, j, k) matmul kernel with an f32 VMEM accumulator (pattern P3).
    `scale` is already folded into the prepared weight; bias (if any) is added
    once, in the k == last epilogue."""

    def _body(x_ref, w_ref, b_ref, o_ref, acc_ref):
        k = pl.program_id(2)

        @pl.when(k == 0)
        def _init():
            acc_ref[...] = jnp.zeros_like(acc_ref)

        # x tile (tm, tk) @ w tile (tk, tn): the weight was pre-transposed to
        # (K, N) at prep time, so no in-kernel (XLU) transpose is needed.
        acc_ref[...] += jnp.dot(x_ref[...], w_ref[...],
                                preferred_element_type=jnp.float32)

        @pl.when(k == pl.num_programs(2) - 1)
        def _finalize():
            acc = acc_ref[...]
            if b_ref is not None:
                acc = acc + b_ref[...]          # f32 bias, once per output tile
            o_ref[...] = acc.astype(o_ref.dtype)

    if has_bias:
        def kernel(x_ref, w_ref, b_ref, o_ref, acc_ref):
            _body(x_ref, w_ref, b_ref, o_ref, acc_ref)
    else:
        def kernel(x_ref, w_ref, o_ref, acc_ref):
            _body(x_ref, w_ref, None, o_ref, acc_ref)
    return kernel


# ---------------------------------------------------------------------------
# Parameter prep (hoisted out of the hot path) + forward
# ---------------------------------------------------------------------------

class LinearParams:
    """Pre-laid-out Linear parameters.  Build ONCE per parameter set."""

    def __init__(self, w_kn, b_row, n, k, np_, kp, compute_dtype):
        self.w_kn = w_kn                # (Kp, Np), compute_dtype, scale folded
        self.b_row = b_row              # (1, Np) f32, or None
        self.n = n
        self.k = k
        self.np_ = np_
        self.kp = kp
        self.compute_dtype = compute_dtype


def prepare_linear(weight, bias, scale, *, compute_dtype=jnp.bfloat16):
    """Fold `scale` into the weight (in f32), transpose to (K, N), zero-pad to
    MXU-aligned (Kp, Np) and cast to the MXU compute dtype.  Per-call code only
    touches x — no per-call weight padding/transpose/cast in HBM."""
    N, K = weight.shape
    coarse = _mxu_coarse_align()
    coarse = coarse if coarse > 128 else None
    Kp = _pad_dim(K, 128, coarse)
    Np = _pad_dim(N, 128, coarse)
    w = weight.astype(jnp.float32) * scale      # works for float or traced scale
    w_kn = jnp.pad(w.T, ((0, Kp - K), (0, Np - N))).astype(compute_dtype)
    b_row = None
    if bias is not None:
        b_row = jnp.pad(bias.astype(jnp.float32), (0, Np - N)).reshape(1, Np)
    return LinearParams(w_kn, b_row, N, K, Np, Kp, compute_dtype)


def linear_apply(params, x):
    """y = x @ (weight * scale)^T + bias  with x: (..., in_features)."""
    orig_dtype = x.dtype
    *lead, K = x.shape
    if K != params.k:
        raise ValueError(f"x last dim {K} != in_features {params.k}")
    M = int(np.prod(lead)) if lead else 1

    cdt = params.compute_dtype
    cb = jnp.dtype(cdt).itemsize
    ob = jnp.dtype(orig_dtype).itemsize
    Np, Kp = params.np_, params.kp
    has_bias = params.b_row is not None

    Mp = _pad_dim(M, 8, 256)

    # ---- generation-aware tile plan --------------------------------------
    vmem_cap = _vmem_capacity_bytes()
    budget = vmem_cap * 3 // 4                 # headroom for compiler scratch
    if budget >= (72 << 20):                   # v5e / v6e class (128 MiB VMEM)
        tm_t, tn_t, tk_t = 512, 1024, 1024
    else:                                      # v7x class (64 MiB per TC)
        tm_t, tn_t, tk_t = 512, 512, 1024

    tm = _largest_tile(Mp, tm_t, 8)
    tn = _largest_tile(Np, tn_t, 128)
    tk = _largest_tile(Kp, tk_t, 128)

    # v7x shards the "parallel" grid axes over 2 TensorCores: make sure at
    # least one parallel axis has >= 2 blocks when the shapes allow it.
    if (Mp // tm) * (Np // tn) < 2:
        if Np >= 256:
            tn = _largest_tile(Np, Np // 2, 128)
        elif Mp >= 16:
            tm = _largest_tile(Mp, Mp // 2, 8)

    grid_i, grid_j, grid_k = Mp // tm, Np // tn, Kp // tk

    # Weight-streaming-bound (decode-like) calls: deepen the weight pipeline.
    w_bufs = 3 if (grid_i == 1 and grid_j * grid_k >= 3) else 2

    def footprint(tk_, tn_):
        f = (2 * tm * tk_ * cb            # x, double-buffered
             + w_bufs * tk_ * tn_ * cb    # weight buffers
             + 2 * tm * tn_ * ob          # output, double-buffered
             + tm * tn_ * 4)              # f32 accumulator
        if has_bias:
            f += 2 * tn_ * 4
        return f

    while footprint(tk, tn) > budget and tk > 128:
        tk = _largest_tile(Kp, tk // 2, 128)
    while footprint(tk, tn) > budget and tn > 128:
        tn = _largest_tile(Np, tn // 2, 128)
    grid_j, grid_k = Np // tn, Kp // tk
    if grid_j * grid_k < 3:
        w_bufs = 2

    # ---- operand prep ------------------------------------------------------
    x2d = x.reshape(M, K).astype(cdt)
    if (Mp, Kp) != (M, K):
        x2d = jnp.pad(x2d, ((0, Mp - M), (0, Kp - K)))   # zero K-pad is exact

    kernel = _make_linear_kernel(has_bias)

    x_spec = pl.BlockSpec((tm, tk), lambda i, j, k: (i, k))
    w_spec = pl.BlockSpec((tk, tn), lambda i, j, k: (k, j))
    if w_bufs == 3:
        try:  # deeper pipelining for the streamed weight; fall back if absent
            w_spec = pl.BlockSpec((tk, tn), lambda i, j, k: (k, j),
                                  pipeline_mode=pl.Buffered(3))
        except (TypeError, AttributeError):
            pass
    in_specs = [x_spec, w_spec]
    operands = [x2d, params.w_kn]
    if has_bias:
        in_specs.append(pl.BlockSpec((1, tn), lambda i, j, k: (0, j)))
        operands.append(params.b_row)

    bytes_accessed = (Mp * Kp * cb * grid_j         # x re-streamed per j block
                      + Kp * Np * cb * grid_i       # w re-streamed per i block
                      + Mp * Np * ob)               # output written once
    if has_bias:
        bytes_accessed += Np * 4 * grid_i

    out2d = pl.pallas_call(
        kernel,
        out_shape=jax.ShapeDtypeStruct((Mp, Np), orig_dtype),
        grid_spec=pltpu.PrefetchScalarGridSpec(
            num_scalar_prefetch=0,
            grid=(grid_i, grid_j, grid_k),
            in_specs=in_specs,
            out_specs=pl.BlockSpec((tm, tn), lambda i, j, k: (i, j)),
            scratch_shapes=[pltpu.VMEM((tm, tn), jnp.float32)],
        ),
        compiler_params=pltpu.CompilerParams(
            dimension_semantics=("parallel", "parallel", "arbitrary"),
            vmem_limit_bytes=int(budget),
        ),
        cost_estimate=pl.CostEstimate(
            flops=2 * Mp * Np * Kp,
            transcendentals=0,
            bytes_accessed=int(bytes_accessed),
        ),
    )(*operands)

    out2d = out2d[:M, :params.n]
    return out2d.reshape(*lead, params.n)


def linear_pallas(x, weight, bias, scale, *, compute_dtype=jnp.bfloat16):
    """One-shot convenience; prefer prepare_linear() once + linear_apply()."""
    return linear_apply(
        prepare_linear(weight, bias, scale, compute_dtype=compute_dtype), x)


def init_linear_params(key, in_features, out_features, bias, variance_scale,
                       weight_scale, dtype=jnp.float32):
    """Deterministic re-implementation of the torch module's __init__."""
    std = float(np.sqrt(variance_scale / in_features))
    if weight_scale:
        weight = jax.random.normal(key, (out_features, in_features), dtype=dtype)
        scale = std
    else:
        weight = std * jax.random.normal(key, (out_features, in_features), dtype=dtype)
        scale = 1.0
    b = jnp.zeros((out_features,), dtype=dtype) if bias else None
    return weight, b, scale


if __name__ == "__main__":
    key = jax.random.PRNGKey(0)
    k_w1, k_x1, k_w2, k_x2 = jax.random.split(key, 4)

    # --- Test 1: small module shapes (bias + weight_scale), both compute paths.
    batch, seq, in_features, out_features = 2, 8, 32, 48
    weight, bias, scale = init_linear_params(
        k_w1, in_features, out_features, bias=True,
        variance_scale=2.0, weight_scale=True)
    x = jax.random.normal(k_x1, (batch, seq, in_features), dtype=jnp.float32)
    ref = x @ (weight * scale).T + bias

    # Exact-path check (f32 MXU operands).
    params_f32 = prepare_linear(weight, bias, scale, compute_dtype=jnp.float32)
    out_f32 = linear_apply(params_f32, x)
    jax.block_until_ready(out_f32)
    np.testing.assert_allclose(np.asarray(out_f32), np.asarray(ref),
                               rtol=1e-5, atol=1e-5)

    # Default fast path (bf16 MXU operands, f32 accumulation).
    params_bf16 = prepare_linear(weight, bias, scale)
    out_bf16 = linear_apply(params_bf16, x)
    jax.block_until_ready(out_bf16)
    np.testing.assert_allclose(np.asarray(out_bf16), np.asarray(ref),
                               rtol=5e-2, atol=5e-2)

    # --- Test 2: decode-like (tiny M, larger N/K), no bias, weight_scale=False.
    # Exercises multi-k accumulation, the no-bias kernel variant and the deeper
    # (Buffered(3)) weight pipeline on a weight-streaming-bound shape.
    M2, in2, out2 = 4, 2048, 2048
    w2, b2, s2 = init_linear_params(
        k_w2, in2, out2, bias=False, variance_scale=1.0, weight_scale=False)
    x2 = jax.random.normal(k_x2, (M2, in2), dtype=jnp.float32)
    ref2 = x2 @ (w2 * s2).T

    params2 = prepare_linear(w2, b2, s2)          # hoisted weight prep
    y2 = linear_apply(params2, x2)
    jax.block_until_ready(y2)
    np.testing.assert_allclose(np.asarray(y2), np.asarray(ref2),
                               rtol=5e-2, atol=5e-2)

    print("KERNEL_OK")
</pallas_src>

<mosaic_0001>
module attributes {stable_mosaic.version = 11 : i64} {
  func.func @kernel(%arg0: i32, %arg1: i32, %arg2: i32, %arg3: memref<8x128xf32, #tpu.memory_space<vmem>>, %arg4: memref<128x128xf32, #tpu.memory_space<vmem>>, %arg5: memref<1x128xf32, #tpu.memory_space<vmem>>, %arg6: memref<8x128xf32, #tpu.memory_space<vmem>>, %arg7: memref<8x128xf32, #tpu.memory_space<vmem>>) attributes {dimension_semantics = [#tpu.dimension_semantics<parallel>, #tpu.dimension_semantics<parallel>, #tpu.dimension_semantics<arbitrary>], iteration_bounds = array<i64: 2, 1, 1>, scalar_prefetch = 0 : i64, scratch_operands = 1 : i64, tpu.core_type = #tpu.core_type<tc>, window_params = [{transform_indices = @transform_0, window_bounds = array<i64: 8, 128>}, {transform_indices = @transform_1, window_bounds = array<i64: 128, 128>}, {transform_indices = @transform_2, window_bounds = array<i64: 1, 128>}, {transform_indices = @transform_3, window_bounds = array<i64: 8, 128>}]} {
    %c0_i32 = arith.constant 0 : i32
    %0 = arith.cmpi eq, %arg2, %c0_i32 : i32
    %1 = arith.extui %0 : i1 to i32
    %c0_i32_0 = arith.constant 0 : i32
    %2 = arith.cmpi ne, %1, %c0_i32_0 : i32
    scf.if %2 {
      %cst_10 = arith.constant 0.000000e+00 : f32
      %12 = vector.broadcast %cst_10 : f32 to vector<8x128xf32>
      %c0_11 = arith.constant 0 : index
      %c0_12 = arith.constant 0 : index
      %13 = vector.load %arg7[%c0_11, %c0_12] : memref<8x128xf32, #tpu.memory_space<vmem>>, vector<8x128xf32>
      tpu.vector_store %arg7[%c0_11, %c0_12], %12 {strides = array<i32>} : memref<8x128xf32, #tpu.memory_space<vmem>>, vector<8x128xf32>,
    } else {
    }
    %c0 = arith.constant 0 : index
    %c0_1 = arith.constant 0 : index
    %3 = vector.load %arg7[%c0, %c0_1] : memref<8x128xf32, #tpu.memory_space<vmem>>, vector<8x128xf32>
    %c0_2 = arith.constant 0 : index
    %c0_3 = arith.constant 0 : index
    %4 = vector.load %arg3[%c0_2, %c0_3] : memref<8x128xf32, #tpu.memory_space<vmem>>, vector<8x128xf32>
    %c0_4 = arith.constant 0 : index
    %c0_5 = arith.constant 0 : index
    %5 = vector.load %arg4[%c0_4, %c0_5] : memref<128x128xf32, #tpu.memory_space<vmem>>, vector<128x128xf32>
    %cst = arith.constant dense<0.000000e+00> : vector<8x128xf32>
    %6 = tpu.matmul %4, %5, %cst {dimension_numbers = #tpu.dot_dimension_numbers<[1], [0], [0], [1], [0, 0, 1, 1], [], []>} : vector<8x128xf32>, vector<128x128xf32>, vector<8x128xf32> -> vector<8x128xf32>
    %7 = arith.addf %3, %6 : vector<8x128xf32>
    %c0_6 = arith.constant 0 : index
    %c0_7 = arith.constant 0 : index
    %8 = vector.load %arg7[%c0_6, %c0_7] : memref<8x128xf32, #tpu.memory_space<vmem>>, vector<8x128xf32>
    tpu.vector_store %arg7[%c0_6, %c0_7], %7 {strides = array<i32>} : memref<8x128xf32, #tpu.memory_space<vmem>>, vector<8x128xf32>,
    %c0_i32_8 = arith.constant 0 : i32
    %9 = arith.cmpi eq, %arg2, %c0_i32_8 : i32
    %10 = arith.extui %9 : i1 to i32
    %c0_i32_9 = arith.constant 0 : i32
    %11 = arith.cmpi ne, %10, %c0_i32_9 : i32
    scf.if %11 {
      %c0_10 = arith.constant 0 : index
      %c0_11 = arith.constant 0 : index
      %12 = vector.load %arg7[%c0_10, %c0_11] : memref<8x128xf32, #tpu.memory_space<vmem>>, vector<8x128xf32>
      %c0_12 = arith.constant 0 : index
      %c0_13 = arith.constant 0 : index
      %13 = vector.load %arg5[%c0_12, %c0_13] : memref<1x128xf32, #tpu.memory_space<vmem>>, vector<1x128xf32>
      %14 = vector.broadcast %13 : vector<1x128xf32> to vector<8x128xf32>
      %15 = arith.addf %12, %14 : vector<8x128xf32>
      %c0_14 = arith.constant 0 : index
      %c0_15 = arith.constant 0 : index
      %16 = vector.load %arg6[%c0_14, %c0_15] : memref<8x128xf32, #tpu.memory_space<vmem>>, vector<8x128xf32>
      tpu.vector_store %arg6[%c0_14, %c0_15], %15 {strides = array<i32>} : memref<8x128xf32, #tpu.memory_space<vmem>>, vector<8x128xf32>,
    } else {
    }
    return
  }
  func.func @transform_0(%arg0: i32, %arg1: i32, %arg2: i32) -> (i32, i32) {
    %c0_i32 = arith.constant 0 : i32
    return %arg0, %arg2 : i32, i32
  }
  func.func @transform_1(%arg0: i32, %arg1: i32, %arg2: i32) -> (i32, i32) {
    %c0_i32 = arith.constant 0 : i32
    return %arg2, %arg1 : i32, i32
  }
  func.func @transform_2(%arg0: i32, %arg1: i32, %arg2: i32) -> (i32, i32) {
    %c0_i32 = arith.constant 0 : i32
    %c0_i32_0 = arith.constant 0 : i32
    return %c0_i32, %arg1 : i32, i32
  }
  func.func @transform_3(%arg0: i32, %arg1: i32, %arg2: i32) -> (i32, i32) {
    %c0_i32 = arith.constant 0 : i32
    return %arg0, %arg1 : i32, i32
  }
}

</mosaic_0001>

<llo_original>
// kernel: tpu_custom_call.1
$region0: #{tpu_custom_call.1}
  #allocation0 [shape = 'u32[]', space=smem, size = 0x4, offset = 0x4, fixed_abs, tag = 'smem constant byte address 0x4 - core index']
  #allocation1 [shape = 'u32[144,128]{1,0:T(1,128)}', space=vmem, size = 0x12000, scoped, tag = 'internal scratch']
  #allocation2 [shape = 'f32[8,128]{1,0:T(8,128)}', space=vmem, size = 0x1000, scoped, tag = 'scratch operand']
  %s0 = inlined_call_operand.hbm [shape: f32[16,128], index: 0, kind: input, shape index: {}]
  %s1 = inlined_call_operand.hbm [shape: f32[128,128], index: 1, kind: input, shape index: {}]
  %s2 = inlined_call_operand.vmem [shape: f32[1,128], index: 2, kind: input, shape index: {}]
  %s3 = inlined_call_operand.hbm [shape: f32[16,128], index: 3, kind: output, shape index: {}]
  %s4 = sld [smem:[#allocation0]]
  $region61: #{tpu_custom_call.1} parent=0
    _
  %s6 = ssub.s32 1, %s4
  %s7 = scalar_select 0, %s6, %s4
  $region1: #{tpu_custom_call.1} parent=0
    #allocation3 [shape = 'u8[8192]{0}', space=vmem, size = 0x2000, scoped, tag = 'input window, operand 0']
    #allocation4 [shape = 's32[2]{0}', space=sflag, size = 0x8, scoped, tag = 'scoped memory for tpu_custom_call.1']
    #allocation5 [shape = 's32[2]{0}', space=sflag, size = 0x8, scoped, tag = 'scoped memory for tpu_custom_call.1']
    #allocation6 [shape = 'u8[65536]{0}', space=vmem, size = 0x10000, scoped, tag = 'input window, operand 1, single buffered']
    #allocation7 [shape = 's32[1]{0}', space=sflag, size = 0x4, scoped, tag = 'scoped memory for tpu_custom_call.1']
    #allocation8 [shape = 'u8[8192]{0}', space=vmem, size = 0x2000, scoped, tag = 'output window, operand 0']
    %8 = vsyncpa [#allocation4], 0
    %s9 = scalar_lea.sflag [#allocation4], 1
    %10 = vsyncpa %s9, 0
    %11 = vsyncpa [#allocation7], 0
    %12 = vsyncpa [#allocation5], 0
    %s13 = scalar_lea.sflag [#allocation5], 1
    %14 = vsyncpa %s13, 0
    loop: start=0, step=1, limit=4
    $region2: #{tpu_custom_call.1} parent=1 // loop_pre_header
      _
    $region3: #{tpu_custom_call.1} parent=1 // loop_header
      %s16 = sphi 0, %s20
      %p17 = scmp.ge.s32.totalorder %s16, 4
      %s23 = sphi 0, %s42
      %s24 = sphi 0, %s38
      %s25 = sphi 0, %s34
      %s26 = sphi 0, %s23
      %s27 = sphi 0, %s24
      %s28 = sphi 0, %s25
      %s29 = sphi 0, %s26
      %s30 = sphi 0, %s27
      %s31 = sphi 0, %s28
      %s47 = sphi 0, %s49
      %s50 = sphi 0, %s47
      %s51 = sphi 0, %s50
      %s67 = sphi 0, %s51
      %s75 = sphi 0, %s77
      %s78 = sphi 0, %s75
      %s79 = sphi 0, %s78
      %s95 = sphi 0, %s79
      %s101 = sphi 0, %s103
      %s104 = sphi 0, %s101
      %s105 = sphi 0, %s104
      %s121 = sphi 0, %s105
      %s129 = sphi 0, %s131
      %s132 = sphi 0, %s129
      %s133 = sphi 0, %s132
      %s149 = sphi 0, %s133
    $region4: #{tpu_custom_call.1} parent=1 // loop_header_branch
      %19 = sbr.rel (%p17) target = $region8
    $region5: #{tpu_custom_call.1} parent=1 // loop_body
      %s21 = ssub.s32 %s16, 1
      %s22 = ssub.s32 %s16, 2
      %s32 = sadd.s32 1, %s25
      %p33 = scmp.ge.s32.totalorder %s32, 1
      %s34 = scalar_select %p33, 0, %s32
      %s35 = sadd.s32 1, %s24
      %s36 = scalar_select %p33, %s35, %s24
      %p37 = scmp.ge.s32.totalorder %s36, 1
      %s38 = scalar_select %p37, 0, %s36
      %s39 = sadd.s32 1, %s23
      %s40 = scalar_select %p37, %s39, %s23
      %p41 = scmp.ge.s32.totalorder %s40, 2
      %s42 = scalar_select %p41, 0, %s40
      %s43 = ssub.s32 %s23, %s42
      %s44 = ssub.s32 %s25, %s34
      %s45 = sor.u32 %s43, %s44
      %p46 = scmp.eq.s32.totalorder %s45, 0
      %s48 = sadd.s32 %s47, 1
      %s49 = scalar_select %p46, %s47, %s48
      %p52 = pneg %p46
      %p53 = scmp.eq.s32.totalorder %s16, 1
      %p54 = por %p52, %p53
      %p55 = scmp.ne.s32.totalorder %s47, %s50
      %p56 = scmp.eq.s32.totalorder %s16, 0
      %p57 = por %p55, %p56
      %p58 = scmp.ne.s32.totalorder %s47, %s50
      %p59 = scmp.eq.s32.totalorder %s21, 1
      %p60 = por %p58, %p59
      %p61 = scmp.ne.s32.totalorder %s50, %s51
      %p62 = scmp.eq.s32.totalorder %s21, 0
      %p63 = por %p61, %p62
      %p64 = scmp.ne.s32.totalorder %s50, %s51
      %p65 = scmp.eq.s32.totalorder %s22, 1
      %p66 = por %p64, %p65
      %p68 = scmp.ne.s32.totalorder %s51, %s67
      %p69 = scmp.eq.s32.totalorder %s22, 0
      %p70 = por %p68, %p69
      %s71 = ssub.s32 %s25, %s34
      %s72 = ssub.s32 %s24, %s38
      %s73 = sor.u32 %s71, %s72
      %p74 = scmp.eq.s32.totalorder %s73, 0
      %s76 = sadd.s32 %s75, 1
      %s77 = scalar_select %p74, %s75, %s76
      %p80 = pneg %p74
      %p81 = scmp.eq.s32.totalorder %s16, 1
      %p82 = por %p80, %p81
      %p83 = scmp.ne.s32.totalorder %s75, %s78
      %p84 = scmp.eq.s32.totalorder %s16, 0
      %p85 = por %p83, %p84
      %p86 = scmp.ne.s32.totalorder %s75, %s78
      %p87 = scmp.eq.s32.totalorder %s21, 1
      %p88 = por %p86, %p87
      %p89 = scmp.ne.s32.totalorder %s78, %s79
      %p90 = scmp.eq.s32.totalorder %s21, 0
      %p91 = por %p89, %p90
      %p92 = scmp.ne.s32.totalorder %s78, %s79
      %p93 = scmp.eq.s32.totalorder %s22, 1
      %p94 = por %p92, %p93
      %p96 = scmp.ne.s32.totalorder %s79, %s95
      %p97 = scmp.eq.s32.totalorder %s22, 0
      %p98 = por %p96, %p97
      %s99 = ssub.s32 %s24, %s38
      %p100 = scmp.eq.s32.totalorder %s99, 0
      %s102 = sadd.s32 %s101, 1
      %s103 = scalar_select %p100, %s101, %s102
      %p106 = pneg %p100
      %p107 = scmp.eq.s32.totalorder %s16, 1
      %p108 = por %p106, %p107
      %p109 = scmp.ne.s32.totalorder %s101, %s104
      %p110 = scmp.eq.s32.totalorder %s16, 0
      %p111 = por %p109, %p110
      %p112 = scmp.ne.s32.totalorder %s101, %s104
      %p113 = scmp.eq.s32.totalorder %s21, 1
      %p114 = por %p112, %p113
      %p115 = scmp.ne.s32.totalorder %s104, %s105
      %p116 = scmp.eq.s32.totalorder %s21, 0
      %p117 = por %p115, %p116
      %p118 = scmp.ne.s32.totalorder %s104, %s105
      %p119 = scmp.eq.s32.totalorder %s22, 1
      %p120 = por %p118, %p119
      %p122 = scmp.ne.s32.totalorder %s105, %s121
      %p123 = scmp.eq.s32.totalorder %s22, 0
      %p124 = por %p122, %p123
      %s125 = ssub.s32 %s23, %s42
      %s126 = ssub.s32 %s24, %s38
      %s127 = sor.u32 %s125, %s126
      %p128 = scmp.eq.s32.totalorder %s127, 0
      %s130 = sadd.s32 %s129, 1
      %s131 = scalar_select %p128, %s129, %s130
      %p134 = pneg %p128
      %p135 = scmp.eq.s32.totalorder %s16, 1
      %p136 = por %p134, %p135
      %p137 = scmp.ne.s32.totalorder %s129, %s132
      %p138 = scmp.eq.s32.totalorder %s16, 0
      %p139 = por %p137, %p138
      %p140 = scmp.ne.s32.totalorder %s129, %s132
      %p141 = scmp.eq.s32.totalorder %s21, 1
      %p142 = por %p140, %p141
      %p143 = scmp.ne.s32.totalorder %s132, %s133
      %p144 = scmp.eq.s32.totalorder %s21, 0
      %p145 = por %p143, %p144
      %p146 = scmp.ne.s32.totalorder %s132, %s133
      %p147 = scmp.eq.s32.totalorder %s22, 1
      %p148 = por %p146, %p147
      %p150 = scmp.ne.s32.totalorder %s133, %s149
      %p151 = scmp.eq.s32.totalorder %s22, 0
      %p152 = por %p150, %p151
      %p153 = scmp.le.s32.totalorder 1, %s16
      %p154 = scmp.lt.s32.totalorder %s16, 3
      %p155 = pnand %p153, %p154
      %p156 = pneg %p155
      // Predicated region
      $region9: #{tpu_custom_call.1} parent=5 // pred_check
        _
      $region10: #{tpu_custom_call.1} parent=5 // pred_check_branch
        %158 = sbr.rel (%p155) target = $region12
      $region11: #{tpu_custom_call.1} parent=5 // pred_region
        %s159 = ssub.s32 %s16, 1
        // Predicated region
        $region13: #{tpu_custom_call.1} parent=11 // pred_check
          %p160 = pneg %p91
        $region14: #{tpu_custom_call.1} parent=11 // pred_check_branch
          %162 = sbr.rel (%p160) target = $region16
        $region15: #{tpu_custom_call.1} parent=11 // pred_region
          %s163 = smul.u32 16, %s28
          %s165 = ssub.s32 2048, 2048
          %166 = vsyncadd [#allocation7], %s165
          %s167 = sadd.s32 %s27, %s163
          %s168 = smul.addr %s167, 128
          %s169 = scalar_lea.hbm %s1, %s168
          %s170 = sshll.u32 [#allocation6], 4
          %s171 = int_to_ptr.vmem [resolvable:$true] %s170
          %176 = dma.hbm_to_vmem [thread:$0]  %s169, 2048, %s171, [#allocation7], 128, 128, 8
        $region16: #{tpu_custom_call.1} parent=11 // pred_fallthru
          _
        // Predicated region
        $region17: #{tpu_custom_call.1} parent=11 // pred_check
          %p177 = pneg %p117
        $region18: #{tpu_custom_call.1} parent=11 // pred_check_branch
          %179 = sbr.rel (%p177) target = $region20
        $region19: #{tpu_custom_call.1} parent=11 // pred_region
          %p180 = scmp.lt.s32.totalorder %s27, 0
          %s181 = scalar_select %p180, %s27, 0
          %s182 = scalar_lea.vmem %s2, %s181
        $region20: #{tpu_custom_call.1} parent=11 // pred_fallthru
          _
      $region12: #{tpu_custom_call.1} parent=5 // pred_fallthru
        _
      %p183 = scmp.lt.s32.totalorder %s16, 2
      // Predicated region
      $region21: #{tpu_custom_call.1} parent=5 // pred_check
        %p184 = pneg %p183
      $region22: #{tpu_custom_call.1} parent=5 // pred_check_branch
        %186 = sbr.rel (%p184) target = $region24
      $region23: #{tpu_custom_call.1} parent=5 // pred_region
        // Predicated region
        $region25: #{tpu_custom_call.1} parent=23 // pred_check
          %p187 = pneg %p57
        $region26: #{tpu_custom_call.1} parent=23 // pred_check_branch
          %189 = sbr.rel (%p187) target = $region28
        $region27: #{tpu_custom_call.1} parent=23 // pred_region
          %s190 = sand.u32 %s47, 1
          %s191 = scalar_lea.sflag [#allocation4], %s190
          %s192 = sand.u32 %s47, 1
          %s193 = smul.addr %s192, 8
          %s194 = scalar_lea.vmem [#allocation3], %s193
          %s196 = ssub.s32 128, 128
          %197 = vsyncadd %s191, %s196
          %s198 = sadd.s32 %s25, %s23
          %s199 = smul.addr %s198, 128
          %s200 = scalar_lea.hbm %s0, %s199
          %s202 = sshll.u32 %s194, 4
          %s203 = int_to_ptr.vmem [resolvable:$true] %s202
          %205 = dma.hbm_to_vmem [thread:$0]  %s200, 128, %s203, %s191
        $region28: #{tpu_custom_call.1} parent=23 // pred_fallthru
          _
      $region24: #{tpu_custom_call.1} parent=5 // pred_fallthru
        _
      %p206 = scmp.le.s32.totalorder 1, %s16
      %p207 = scmp.lt.s32.totalorder %s16, 3
      %p208 = pnand %p206, %p207
      %p209 = pneg %p208
      // Predicated region
      $region29: #{tpu_custom_call.1} parent=5 // pred_check
        _
      $region30: #{tpu_custom_call.1} parent=5 // pred_check_branch
        %211 = sbr.rel (%p208) target = $region32
      $region31: #{tpu_custom_call.1} parent=5 // pred_region
        %s212 = ssub.s32 %s16, 1
        %s213 = sand.u32 %s50, 1
        %s214 = scalar_lea.sflag [#allocation4], %s213
        %s215 = sand.u32 %s50, 1
        %s216 = smul.addr %s215, 8
        %s217 = scalar_lea.vmem [#allocation3], %s216
        // Predicated region
        $region33: #{tpu_custom_call.1} parent=31 // pred_check
          %p218 = pneg %p63
        $region34: #{tpu_custom_call.1} parent=31 // pred_check_branch
          %220 = sbr.rel (%p218) target = $region36
        $region35: #{tpu_custom_call.1} parent=31 // pred_region
          %221 = dma.done %s214, 128
        $region36: #{tpu_custom_call.1} parent=31 // pred_fallthru
          _
        // Predicated region
        $region37: #{tpu_custom_call.1} parent=31 // pred_check
          %p222 = pneg %p91
        $region38: #{tpu_custom_call.1} parent=31 // pred_check_branch
          %224 = sbr.rel (%p222) target = $region40
        $region39: #{tpu_custom_call.1} parent=31 // pred_region
          %225 = dma.done [#allocation7], 2048
        $region40: #{tpu_custom_call.1} parent=31 // pred_fallthru
          _
        %s226 = sand.u32 %s50, 1
        %s227 = scalar_lea.sflag [#allocation4], %s226
        %s228 = sand.u32 %s50, 1
        %s229 = smul.addr %s228, 8
        %s230 = scalar_lea.vmem [#allocation3], %s229
        %p231 = pneg %p63
        %p232 = pneg %p60
        %p233 = pneg %p91
        %p234 = pneg %p88
        %p235 = scmp.lt.s32.totalorder %s27, 0
        %s236 = scalar_select %p235, %s27, 0
        %s237 = scalar_lea.vmem %s2, %s236
        %p238 = pneg %p117
        %p239 = pneg %p114
        %p240 = pneg %p145
        %p241 = pneg %p142
        %s242 = sand.u32 %s132, 1
        %s243 = scalar_lea.sflag [#allocation5], %s242
        %s244 = sand.u32 %s132, 1
        %s245 = smul.addr %s244, 8
        %s246 = scalar_lea.vmem [#allocation8], %s245
        %s247 = smul.u32 16, %s28
        %p248 = scmp.lt.s32.totalorder %s27, 0
        %s249 = scalar_select %p248, %s27, 0
        %s250 = scalar_lea.vmem %s2, %s249
        %p251 = scmp.eq.s32.totalorder %s28, 0
        // Predicated region
        $region41: #{tpu_custom_call.1} parent=31 // pred_check
          %p252 = pneg %p251
        $region42: #{tpu_custom_call.1} parent=31 // pred_check_branch
          %254 = sbr.rel (%p252) target = $region44
        $region43: #{tpu_custom_call.1} parent=31 // pred_region
          %255 = vst [vmem:[#allocation2] sm:$0xff] 0.0
        $region44: #{tpu_custom_call.1} parent=31 // pred_fallthru
          _
        %v256 = vld [vmem:[#allocation2] sm:$0xff]
        %v257 = vld [vmem:[%s217] sm:$0xff]
        %v258 = vld [vmem:[#allocation6] sm:$0xff]
        %v259 = vld [vmem:[#allocation6 + $0x8] sm:$0xff]
        %v260 = vld [vmem:[#allocation6 + $0x10] sm:$0xff]
        %v261 = vld [vmem:[#allocation6 + $0x18] sm:$0xff]
        %v262 = vld [vmem:[#allocation6 + $0x20] sm:$0xff]
        %v263 = vld [vmem:[#allocation6 + $0x28] sm:$0xff]
        %v264 = vld [vmem:[#allocation6 + $0x30] sm:$0xff]
        %v265 = vld [vmem:[#allocation6 + $0x38] sm:$0xff]
        %v266 = vld [vmem:[#allocation6 + $0x40] sm:$0xff]
        %v267 = vld [vmem:[#allocation6 + $0x48] sm:$0xff]
        %v268 = vld [vmem:[#allocation6 + $0x50] sm:$0xff]
        %v269 = vld [vmem:[#allocation6 + $0x58] sm:$0xff]
        %v270 = vld [vmem:[#allocation6 + $0x60] sm:$0xff]
        %v271 = vld [vmem:[#allocation6 + $0x68] sm:$0xff]
        %v272 = vld [vmem:[#allocation6 + $0x70] sm:$0xff]
        %v273 = vld [vmem:[#allocation6 + $0x78] sm:$0xff]
        %274 = vmatprep.subr.mxu0 0.0
        %275 = vmatpush1.msra.mxu0 %v258
        %276 = vmatprep.subr.mxu0 0.0
        %277 = vmatpush1.msra.mxu0 %v259
        %278 = vmatprep.subr.mxu0 0.0
        %279 = vmatpush1.msra.mxu0 %v260
        %280 = vmatprep.subr.mxu0 0.0
        %281 = vmatpush1.msra.mxu0 %v261
        %282 = vmatprep.subr.mxu0 0.0
        %283 = vmatpush1.msra.mxu0 %v262
        %284 = vmatprep.subr.mxu0 0.0
        %285 = vmatpush1.msra.mxu0 %v263
        %286 = vmatprep.subr.mxu0 0.0
        %287 = vmatpush1.msra.mxu0 %v264
        %288 = vmatprep.subr.mxu0 0.0
        %289 = vmatpush1.msra.mxu0 %v265
        %290 = vmatprep.subr.mxu0 0.0
        %291 = vmatpush1.msra.mxu0 %v266
        %292 = vmatprep.subr.mxu0 0.0
        %293 = vmatpush1.msra.mxu0 %v267
        %294 = vmatprep.subr.mxu0 0.0
        %295 = vmatpush1.msra.mxu0 %v268
        %296 = vmatprep.subr.mxu0 0.0
        %297 = vmatpush1.msra.mxu0 %v269
        %298 = vmatprep.subr.mxu0 0.0
        %299 = vmatpush1.msra.mxu0 %v270
        %300 = vmatprep.subr.mxu0 0.0
        %301 = vmatpush1.msra.mxu0 %v271
        %302 = vmatprep.subr.mxu0 0.0
        %303 = vmatpush1.msra.mxu0 %v272
        %304 = vmatprep.subr.mxu0 0.0
        %305 = vmatpush1.msra.mxu0 %v273
        %306 = vmatprep.subr.mxu0 0.0
        %307 = vmatpush1.msra.mxu0 0.0
        %308 = vmatprep.subr.mxu0 0.0
        %309 = vmatpush1.msra.mxu0 0.0
        %310 = vmatprep.subr.mxu0 0.0
        %311 = vmatpush1.msra.mxu0 0.0
        %312 = vmatprep.subr.mxu0 0.0
        %313 = vmatpush1.msra.mxu0 0.0
        %314 = vmatprep.subr.mxu0 0.0
        %315 = vmatpush1.msra.mxu0 0.0
        %316 = vmatprep.subr.mxu0 0.0
        %317 = vmatpush1.msra.mxu0 0.0
        %318 = vmatprep.subr.mxu0 0.0
        %319 = vmatpush1.msra.mxu0 0.0
        %320 = vmatprep.subr.mxu0 0.0
        %321 = vmatpush1.msra.mxu0 0.0
        %322 = vmatprep.subr.mxu0 0.0
        %323 = vmatpush1.msra.mxu0 0.0
        %324 = vmatprep.subr.mxu0 0.0
        %325 = vmatpush1.msra.mxu0 0.0
        %326 = vmatprep.subr.mxu0 0.0
        %327 = vmatpush1.msra.mxu0 0.0
        %328 = vmatprep.subr.mxu0 0.0
        %329 = vmatpush1.msra.mxu0 0.0
        %330 = vmatprep.subr.mxu0 0.0
        %331 = vmatpush1.msra.mxu0 0.0
        %332 = vmatprep.subr.mxu0 0.0
        %333 = vmatpush1.msra.mxu0 0.0
        %334 = vmatprep.subr.mxu0 0.0
        %335 = vmatpush1.msra.mxu0 0.0
        %336 = vmatprep.subr.mxu0 0.0
        %337 = vmatpush1.msra.mxu0 0.0
        %338 = vmatprep.mubr.f32.mxu0 0.0
        %339 = vmatmul.mubr.f32.gmra.mrb[0].mxu0 %v257
        %v340 = vpop.f32.mrb[0].mxu0
        %v341 = vadd.f32 0.0, %v340
        %v342 = vpop.f32.mrb[0].mxu0
        %343 = vdwg.mxu0
        %v344 = vadd.f32 %v256, %v341
        %345 = vst [vmem:[#allocation2] sm:$0xff] %v344
        // Predicated region
        $region45: #{tpu_custom_call.1} parent=31 // pred_check
          %p346 = pneg %p251
        $region46: #{tpu_custom_call.1} parent=31 // pred_check_branch
          %348 = sbr.rel (%p346) target = $region48
        $region47: #{tpu_custom_call.1} parent=31 // pred_region
          %v349 = vld [vmem:[#allocation2] sm:$0xff]
          %v350 = vld [vmem:[%s250] sm:$0x1]
          %v352 = vlaneseq
          %v353 = vshrl.u32 %v352, 7
          %v354 = vsub.s32 0, %v353
          %v355 = vrot.slane %v350, %v354
          %v357 = vadd.f32 %v349, %v355
          %358 = vst [vmem:[%s246] sm:$0xff] %v357
        $region48: #{tpu_custom_call.1} parent=31 // pred_fallthru
          _
        %s359 = sand.u32 %s132, 1
        %s360 = scalar_lea.sflag [#allocation5], %s359
        %s361 = sand.u32 %s132, 1
        %s362 = smul.addr %s361, 8
        %s363 = scalar_lea.vmem [#allocation8], %s362
        // Predicated region
        $region49: #{tpu_custom_call.1} parent=31 // pred_check
          %p364 = pneg %p142
        $region50: #{tpu_custom_call.1} parent=31 // pred_check_branch
          %366 = sbr.rel (%p364) target = $region52
        $region51: #{tpu_custom_call.1} parent=31 // pred_region
          %s368 = ssub.s32 128, 128
          %369 = vsyncadd %s360, %s368
          %s370 = sadd.s32 %s27, %s26
          %s371 = smul.addr %s370, 128
          %s372 = scalar_lea.hbm %s3, %s371
          %s374 = sshll.u32 %s363, 4
          %s375 = int_to_ptr.vmem [resolvable:$true] %s374
          %377 = dma.vmem_to_hbm [thread:$0]  %s375, 128, %s372, %s360
        $region52: #{tpu_custom_call.1} parent=31 // pred_fallthru
          _
      $region32: #{tpu_custom_call.1} parent=5 // pred_fallthru
        _
      %p378 = scmp.le.s32.totalorder 2, %s16
      // Predicated region
      $region53: #{tpu_custom_call.1} parent=5 // pred_check
        %p379 = pneg %p378
      $region54: #{tpu_custom_call.1} parent=5 // pred_check_branch
        %381 = sbr.rel (%p379) target = $region56
      $region55: #{tpu_custom_call.1} parent=5 // pred_region
        %s382 = ssub.s32 %s16, 2
        // Predicated region
        $region57: #{tpu_custom_call.1} parent=55 // pred_check
          %p383 = pneg %p148
        $region58: #{tpu_custom_call.1} parent=55 // pred_check_branch
          %385 = sbr.rel (%p383) target = $region60
        $region59: #{tpu_custom_call.1} parent=55 // pred_region
          %s386 = sand.u32 %s133, 1
          %s387 = scalar_lea.sflag [#allocation5], %s386
          %s388 = sand.u32 %s133, 1
          %s389 = smul.addr %s388, 8
          %s390 = scalar_lea.vmem [#allocation8], %s389
          %391 = dma.done %s387, 128
        $region60: #{tpu_custom_call.1} parent=55 // pred_fallthru
          _
      $region56: #{tpu_custom_call.1} parent=5 // pred_fallthru
        _
    $region6: #{tpu_custom_call.1} parent=1 // loop_footer
      %s20 = sadd.s32 1, %s16
    $region7: #{tpu_custom_call.1} parent=1 // loop_footer_branch
      %15 = sbr.rel target = $region3
    $region8: #{tpu_custom_call.1} parent=1 // loop_exit
      _
    %392 = vsyncpa [#allocation4], 1
    %s393 = scalar_lea.sflag [#allocation4], 1
    %394 = vsyncpa %s393, 1
    %395 = vsyncpa [#allocation7], 1
    %396 = vsyncpa [#allocation5], 1
    %s397 = scalar_lea.sflag [#allocation5], 1
    %398 = vsyncpa %s397, 1

</llo_original>
